<compile_context>
chip_gen: v6e
topology: v6e:2x2x1
jax: 0.10.0
libtpu: 0.0.40
codegen_flags: <defaults>
</compile_context>

<pallas_src>
import jax
import jax.numpy as jnp
from jax.experimental import pallas as pl
from jax.experimental.pallas import tpu as pltpu

_LANE = 128
_COLS = 512                      # wide lane-dense last dim (multiple of 128)
_TARGET_BLOCK_BYTES = 2 << 20    # ~2 MiB per block -> ~8 MiB live (2 in + 2 out bufs)


def _relu_double_kernel(x_ref, o_ref):
    # y = relu(x); y_cloned = y (clone is a no-op copy); z = y_cloned + y == 2*relu(x)
    o_ref[...] = jnp.maximum(x_ref[...], 0) * 2


def _sublane_pack(dtype):
    itemsize = jnp.dtype(dtype).itemsize
    return max(8, 32 // itemsize)  # 8 for f32, 16 for bf16, 32 for 1-byte dtypes


def module_with_unnecessary_clone(x):
    """z = relu(x) + relu(x), elementwise, preserving shape/dtype (NCHW in)."""
    orig_shape = x.shape
    dtype = x.dtype
    total = x.size
    itemsize = jnp.dtype(dtype).itemsize
    pack = _sublane_pack(dtype)

    # Flatten to a lane-dense 2-D slab [rows, _COLS].
    rows = pl.cdiv(total, _COLS)

    # Sublane-aligned tile_rows targeting ~_TARGET_BLOCK_BYTES per block,
    # but never more rows than the (sublane-rounded-up) input actually needs.
    max_tile_rows = max(pack, (_TARGET_BLOCK_BYTES // (_COLS * itemsize)) // pack * pack)
    needed_rows = pl.cdiv(rows, pack) * pack
    tile_rows = min(max_tile_rows, needed_rows)

    rows_padded = pl.cdiv(rows, tile_rows) * tile_rows
    padded_total = rows_padded * _COLS

    flat = x.reshape(-1)
    if padded_total != total:
        flat = jnp.pad(flat, (0, padded_total - total))
    x2d = flat.reshape(rows_padded, _COLS)

    grid = (rows_padded // tile_rows,)

    out2d = pl.pallas_call(
        _relu_double_kernel,
        out_shape=jax.ShapeDtypeStruct((rows_padded, _COLS), dtype),
        grid_spec=pltpu.PrefetchScalarGridSpec(
            num_scalar_prefetch=0,
            grid=grid,
            in_specs=[pl.BlockSpec((tile_rows, _COLS), lambda i: (i, 0))],
            out_specs=pl.BlockSpec((tile_rows, _COLS), lambda i: (i, 0)),
        ),
        compiler_params=pltpu.CompilerParams(
            dimension_semantics=("parallel",),
        ),
    )(x2d)

    out_flat = out2d.reshape(-1)
    if padded_total != total:
        out_flat = out_flat[:total]
    return out_flat.reshape(orig_shape)


if __name__ == "__main__":
    key = jax.random.PRNGKey(0)
    # Small NCHW input consistent with the elementwise module.
    x = jax.random.normal(key, (2, 4, 16, 16), dtype=jnp.float32)

    z = module_with_unnecessary_clone(x)
    jax.block_until_ready(z)

    # Reference: z = relu(x) + relu(x) = 2 * relu(x)
    ref = jnp.maximum(x, 0.0) * 2.0
    assert z.shape == x.shape and z.dtype == x.dtype
    assert jnp.allclose(z, ref, atol=0.0, rtol=0.0)

    print("KERNEL_OK")
</pallas_src>

<mosaic_0001>
module attributes {stable_mosaic.version = 11 : i64} {
  func.func @_relu_double_kernel(%arg0: i32, %arg1: memref<8x512xf32, #tpu.memory_space<vmem>>, %arg2: memref<8x512xf32, #tpu.memory_space<vmem>>) attributes {dimension_semantics = [#tpu.dimension_semantics<parallel>], iteration_bounds = array<i64: 1>, scalar_prefetch = 0 : i64, scratch_operands = 0 : i64, tpu.core_type = #tpu.core_type<tc>, window_params = [{transform_indices = @transform_0, window_bounds = array<i64: 8, 512>}, {transform_indices = @transform_1, window_bounds = array<i64: 8, 512>}]} {
    %c0 = arith.constant 0 : index
    %c0_0 = arith.constant 0 : index
    %0 = vector.load %arg1[%c0, %c0_0] : memref<8x512xf32, #tpu.memory_space<vmem>>, vector<8x512xf32>
    %cst = arith.constant 0.000000e+00 : f32
    %1 = vector.broadcast %cst : f32 to vector<8x512xf32>
    %2 = arith.maximumf %0, %1 : vector<8x512xf32>
    %cst_1 = arith.constant 2.000000e+00 : f32
    %3 = vector.broadcast %cst_1 : f32 to vector<8x512xf32>
    %4 = arith.mulf %2, %3 : vector<8x512xf32>
    %c0_2 = arith.constant 0 : index
    %c0_3 = arith.constant 0 : index
    %5 = vector.load %arg2[%c0_2, %c0_3] : memref<8x512xf32, #tpu.memory_space<vmem>>, vector<8x512xf32>
    tpu.vector_store %arg2[%c0_2, %c0_3], %4 {strides = array<i32>} : memref<8x512xf32, #tpu.memory_space<vmem>>, vector<8x512xf32>,
    return
  }
  func.func @transform_0(%arg0: i32) -> (i32, i32) {
    %c0_i32 = arith.constant 0 : i32
    %c0_i32_0 = arith.constant 0 : i32
    return %arg0, %c0_i32 : i32, i32
  }
  func.func @transform_1(%arg0: i32) -> (i32, i32) {
    %c0_i32 = arith.constant 0 : i32
    %c0_i32_0 = arith.constant 0 : i32
    return %arg0, %c0_i32 : i32, i32
  }
}

</mosaic_0001>

<llo_original>
// kernel: tpu_custom_call.1
$region0: #{tpu_custom_call.1}
  #allocation0 [shape = 'u32[]', space=smem, size = 0x4, offset = 0x4, fixed_abs, tag = 'smem constant byte address 0x4 - core index']
  #allocation1 [shape = 'u32[144,128]{1,0:T(1,128)}', space=vmem, size = 0x12000, scoped, tag = 'internal scratch']
  %s0 = inlined_call_operand.hbm [shape: f32[8,512], index: 0, kind: input, shape index: {}]
  %s1 = inlined_call_operand.hbm [shape: f32[8,512], index: 1, kind: output, shape index: {}]
  %s2 = sld [smem:[#allocation0]]
  $region18: #{tpu_custom_call.1} parent=0
    _
  %s4 = ssub.s32 1, %s2
  %s5 = scalar_select 0, %s4, %s2
  $region1: #{tpu_custom_call.1} parent=0
    #allocation2 [shape = 'u8[16384]{0}', space=vmem, size = 0x4000, scoped, tag = 'input window, operand 0, single buffered']
    #allocation3 [shape = 's32[1]{0}', space=sflag, size = 0x4, scoped, tag = 'scoped memory for tpu_custom_call.1']
    #allocation4 [shape = 's32[1]{0}', space=sflag, size = 0x4, scoped, tag = 'scoped memory for tpu_custom_call.1']
    #allocation5 [shape = 'u8[16384]{0}', space=vmem, size = 0x4000, scoped, tag = 'output window, operand 0, single buffered']
    %6 = vsyncpa [#allocation3], 0
    %7 = vsyncpa [#allocation4], 0
    // Predicated region
    $region2: #{tpu_custom_call.1} parent=1 // pred_check
      _
    $region3: #{tpu_custom_call.1} parent=1 // pred_check_branch
      %9 = sbr.rel (0) target = $region5
    $region4: #{tpu_custom_call.1} parent=1 // pred_region
      %s11 = ssub.s32 512, 512
      %12 = vsyncadd [#allocation3], %s11
      %s14 = sshll.u32 [#allocation2], 4
      %s15 = int_to_ptr.vmem [resolvable:$true] %s14
      %17 = dma.hbm_to_vmem [thread:$0]  %s0, 512, %s15, [#allocation3]
    $region5: #{tpu_custom_call.1} parent=1 // pred_fallthru
      _
    // Predicated region
    $region6: #{tpu_custom_call.1} parent=1 // pred_check
      _
    $region7: #{tpu_custom_call.1} parent=1 // pred_check_branch
      %19 = sbr.rel (0) target = $region9
    $region8: #{tpu_custom_call.1} parent=1 // pred_region
      %20 = dma.done [#allocation3], 512
    $region9: #{tpu_custom_call.1} parent=1 // pred_fallthru
      _
    %v21 = vld [vmem:[#allocation2] sm:$0xff]
    %v22 = vld [vmem:[#allocation2 + $0x8] sm:$0xff]
    %v23 = vld [vmem:[#allocation2 + $0x10] sm:$0xff]
    %v24 = vld [vmem:[#allocation2 + $0x18] sm:$0xff]
    %v25 = vmax.f32 %v21, 0.0
    %v26 = vmax.f32 %v22, 0.0
    %v27 = vmax.f32 %v23, 0.0
    %v28 = vmax.f32 %v24, 0.0
    %v29 = vmul.f32 %v25, 2.0
    %v30 = vmul.f32 %v26, 2.0
    %v31 = vmul.f32 %v27, 2.0
    %v32 = vmul.f32 %v28, 2.0
    %33 = vst [vmem:[#allocation5] sm:$0xff] %v29
    %34 = vst [vmem:[#allocation5 + $0x8] sm:$0xff] %v30
    %35 = vst [vmem:[#allocation5 + $0x10] sm:$0xff] %v31
    %36 = vst [vmem:[#allocation5 + $0x18] sm:$0xff] %v32
    // Predicated region
    $region10: #{tpu_custom_call.1} parent=1 // pred_check
      _
    $region11: #{tpu_custom_call.1} parent=1 // pred_check_branch
      %38 = sbr.rel (0) target = $region13
    $region12: #{tpu_custom_call.1} parent=1 // pred_region
      %s40 = ssub.s32 512, 512
      %41 = vsyncadd [#allocation4], %s40
      %s43 = sshll.u32 [#allocation5], 4
      %s44 = int_to_ptr.vmem [resolvable:$true] %s43
      %46 = dma.vmem_to_hbm [thread:$0]  %s44, 512, %s1, [#allocation4]
    $region13: #{tpu_custom_call.1} parent=1 // pred_fallthru
      _
    // Predicated region
    $region14: #{tpu_custom_call.1} parent=1 // pred_check
      _
    $region15: #{tpu_custom_call.1} parent=1 // pred_check_branch
      %48 = sbr.rel (0) target = $region17
    $region16: #{tpu_custom_call.1} parent=1 // pred_region
      %49 = dma.done [#allocation4], 512
    $region17: #{tpu_custom_call.1} parent=1 // pred_fallthru
      _
    %50 = vsyncpa [#allocation3], 1
    %51 = vsyncpa [#allocation4], 1

</llo_original>
